<compile_context>
chip_gen: v6e
topology: v6e:2x2x1
jax: 0.10.0
libtpu: 0.0.40
codegen_flags: <defaults>
</compile_context>

<pallas_src>
import jax
import jax.numpy as jnp
from jax.experimental import pallas as pl
from jax.experimental.pallas import tpu as pltpu

TB_MAX = 512  # examples per grid step; 256-1024 all fit VMEM, 512 is a good default


def _round_up(n, m):
    return (n + m - 1) // m * m


def _pwl_kernel(x_ref, w_ref, res_ref, out_ref):
    """One grid step = TB examples.

    x_ref   : VMEM f32 (TB, n_in)         batch tile of inputs (natural layout)
    w_ref   : VMEM f32 (n_out_pad, n_in)  exp(weight), VMEM-resident across grid
    res_ref : VMEM i32 (1, TB)            res ids for this tile
    out_ref : VMEM f32 (1, TB)            lane-dense outputs for this tile
    """
    # Gather + dot fused on the MXU: Yt[o, b] = sum_i expW[o, i] * x[b, i].
    yt = jax.lax.dot_general(
        w_ref[...], x_ref[...],
        dimension_numbers=(((1,), (1,)), ((), ())),   # contract the shared n_in dim
        preferred_element_type=jnp.float32)           # -> (n_out_pad, TB)
    # Pick row res[b] of column b with a one-hot mask and a sublane reduce; the
    # result lands directly in lane-dense (1, TB) layout (unmasked stores).
    row_ids = jax.lax.broadcasted_iota(jnp.int32, yt.shape, 0)
    picked = jnp.where(row_ids == res_ref[...], yt, 0.0)
    out_ref[...] = jnp.sum(picked, axis=0, keepdims=True)


@jax.jit
def positive_weights_linear_forward(weight, x, res_id):
    """Batched forward: out[b] = exp(weight[res_id[b]]) @ x[b].

    weight : (n_out, n_in) float  raw (un-exp'd) weight, as in the module
    x      : (B, n_in)     float
    res_id : (B,)          integer
    returns: (B,) float32
    """
    n_out, n_in = weight.shape
    B = x.shape[0]

    tb = min(TB_MAX, _round_up(B, 8))    # full-sublane tile, capped by the batch
    b_pad = _round_up(B, tb)
    n_out_pad = _round_up(n_out, 128)    # MXU-aligned out dim (246 -> 256)

    # exp() once per call, outside the per-step path (megacore-safe). Padded
    # rows are zero and are never selected by the one-hot mask.
    w_exp = jnp.exp(weight.astype(jnp.float32))
    w_exp = jnp.pad(w_exp, ((0, n_out_pad - n_out), (0, 0)))

    # x keeps its natural n_in lane layout; only batch rows get padded, and
    # only when B is not already a multiple of the tile.
    x = x.astype(jnp.float32)
    res = jnp.clip(res_id.astype(jnp.int32), 0, n_out - 1)
    if b_pad != B:
        x = jnp.pad(x, ((0, b_pad - B), (0, 0)))
        res = jnp.pad(res, (0, b_pad - B))
    res2d = res.reshape(1, b_pad)

    out = pl.pallas_call(
        _pwl_kernel,
        out_shape=jax.ShapeDtypeStruct((1, b_pad), jnp.float32),
        grid_spec=pltpu.PrefetchScalarGridSpec(
            num_scalar_prefetch=0,
            grid=(b_pad // tb,),
            in_specs=[
                pl.BlockSpec((tb, n_in), lambda i: (i, 0)),
                # Constant index_map -> exp'd weight DMA'd once, VMEM-resident.
                pl.BlockSpec((n_out_pad, n_in), lambda i: (0, 0)),
                pl.BlockSpec((1, tb), lambda i: (0, i)),
            ],
            out_specs=pl.BlockSpec((1, tb), lambda i: (0, i)),
        ),
        compiler_params=pltpu.CompilerParams(
            dimension_semantics=("parallel",),   # v7x: 2 TensorCores split the batch
        ),
    )(x, w_exp, res2d)
    return out[0, :B]


def positive_weights_linear_forward_single(weight, input_x, res_id):
    """Mirrors the PyTorch forward(input_x (in_features,), res_id) -> scalar."""
    out = positive_weights_linear_forward(
        weight, input_x.reshape(1, -1), jnp.reshape(res_id, (1,)))
    return out[0]


def reference_forward_batched(weight, x, res_id):
    """Pure-JAX (elementwise f32, no matmul) mirror of the PyTorch forward."""
    w_rows = jnp.exp(weight.astype(jnp.float32))[res_id]
    return jnp.sum(w_rows * x.astype(jnp.float32), axis=-1)


if __name__ == "__main__":
    key = jax.random.PRNGKey(0)
    k_w, k_x, k_r, k_x2, k_r2 = jax.random.split(key, 5)

    N_IN, N_OUT = 373, 246  # as in the parent model

    # Xavier-uniform weight, as in reset_parameters().
    bound = float(jnp.sqrt(6.0 / (N_IN + N_OUT)))
    weight = jax.random.uniform(k_w, (N_OUT, N_IN), jnp.float32, -bound, bound)

    # --- Small batch (ragged, single 8-row tile) ---------------------------
    B = 6
    x = jax.random.uniform(k_x, (B, N_IN), jnp.float32)
    res_id = jax.random.randint(k_r, (B,), 0, N_OUT)

    out = jax.block_until_ready(positive_weights_linear_forward(weight, x, res_id))
    ref = reference_forward_batched(weight, x, res_id)
    # Loose tolerance: the MXU may evaluate the f32 contraction with bf16 passes.
    assert jnp.allclose(out, ref, rtol=2e-2, atol=1e-3), (out, ref)

    # --- Row-selection check that is robust to MXU pass precision ----------
    # exp(w_sel)[r, :] == (r + 1) / 2 and every x_sel value is exactly bf16
    # representable, so the kernel matches the f32 reference to ~1e-5 even
    # under worst-case bf16 MXU passes; a wrongly gathered row is off by at
    # least ~0.4%, far outside the 2e-4 tolerance.
    w_sel = jnp.log((jnp.arange(N_OUT, dtype=jnp.float32)[:, None] + 1.0) / 2.0
                    * jnp.ones((1, N_IN), jnp.float32))
    x_sel = (jnp.arange(B * N_IN, dtype=jnp.float32).reshape(B, N_IN)
             * 11.0 % 64.0) / 64.0
    out_sel = jax.block_until_ready(
        positive_weights_linear_forward(w_sel, x_sel, res_id))
    ref_sel = reference_forward_batched(w_sel, x_sel, res_id)
    assert jnp.allclose(out_sel, ref_sel, rtol=2e-4), (out_sel, ref_sel)

    # --- Larger batch: multiple 512-row tiles + ragged tail ----------------
    B2 = 1030
    x2 = jax.random.uniform(k_x2, (B2, N_IN), jnp.float32)
    res2 = jax.random.randint(k_r2, (B2,), 0, N_OUT)
    out2 = jax.block_until_ready(positive_weights_linear_forward(weight, x2, res2))
    ref2 = reference_forward_batched(weight, x2, res2)
    assert jnp.allclose(out2, ref2, rtol=2e-2, atol=1e-3)

    # --- Single-example call, matching the PyTorch forward signature -------
    out1 = jax.block_until_ready(
        positive_weights_linear_forward_single(weight, x[0], res_id[0]))
    assert jnp.allclose(out1, ref[0], rtol=2e-2, atol=1e-3)

    print("KERNEL_OK")
</pallas_src>

<mosaic_0001>
module attributes {stable_mosaic.version = 11 : i64} {
  func.func @_pwl_kernel(%arg0: i32, %arg1: memref<8x373xf32, #tpu.memory_space<vmem>>, %arg2: memref<256x373xf32, #tpu.memory_space<vmem>>, %arg3: memref<1x8xi32, #tpu.memory_space<vmem>>, %arg4: memref<1x8xf32, #tpu.memory_space<vmem>>) attributes {dimension_semantics = [#tpu.dimension_semantics<parallel>], iteration_bounds = array<i64: 1>, scalar_prefetch = 0 : i64, scratch_operands = 0 : i64, tpu.core_type = #tpu.core_type<tc>, window_params = [{transform_indices = @transform_0, window_bounds = array<i64: 8, 373>}, {pipeline_mode = #tpu.pipeline_mode<synchronous>, transform_indices = @transform_1, window_bounds = array<i64: 256, 373>}, {transform_indices = @transform_2, window_bounds = array<i64: 1, 8>}, {transform_indices = @transform_3, window_bounds = array<i64: 1, 8>}]} {
    %c0 = arith.constant 0 : index
    %c0_0 = arith.constant 0 : index
    %0 = vector.load %arg2[%c0, %c0_0] : memref<256x373xf32, #tpu.memory_space<vmem>>, vector<256x373xf32>
    %c0_1 = arith.constant 0 : index
    %c0_2 = arith.constant 0 : index
    %1 = vector.load %arg1[%c0_1, %c0_2] : memref<8x373xf32, #tpu.memory_space<vmem>>, vector<8x373xf32>
    %cst = arith.constant dense<0.000000e+00> : vector<256x8xf32>
    %2 = tpu.matmul %0, %1, %cst {dimension_numbers = #tpu.dot_dimension_numbers<[1], [1], [0], [0], [0, 0, 1, 0], [], []>} : vector<256x373xf32>, vector<8x373xf32>, vector<256x8xf32> -> vector<256x8xf32>
    %3 = tpu.iota {dimensions = array<i32: 0>} : vector<256x8xi32>
    %c0_3 = arith.constant 0 : index
    %c0_4 = arith.constant 0 : index
    %4 = vector.load %arg3[%c0_3, %c0_4] : memref<1x8xi32, #tpu.memory_space<vmem>>, vector<1x8xi32>
    %5 = vector.broadcast %4 : vector<1x8xi32> to vector<256x8xi32>
    %6 = arith.cmpi eq, %3, %5 : vector<256x8xi32>
    %cst_5 = arith.constant 0.000000e+00 : f32
    %7 = vector.broadcast %cst_5 : f32 to vector<256x8xf32>
    %8 = arith.select %6, %2, %7 : vector<256x8xi1>, vector<256x8xf32>
    %cst_6 = arith.constant dense<0.000000e+00> : vector<8xf32>
    %9 = vector.multi_reduction <add>, %8, %cst_6 [0] : vector<256x8xf32> to vector<8xf32>
    %10 = vector.shape_cast %9 : vector<8xf32> to vector<1x8xf32>
    %c0_7 = arith.constant 0 : index
    %c0_8 = arith.constant 0 : index
    %11 = vector.load %arg4[%c0_7, %c0_8] : memref<1x8xf32, #tpu.memory_space<vmem>>, vector<1x8xf32>
    tpu.vector_store %arg4[%c0_7, %c0_8], %10 {strides = array<i32>} : memref<1x8xf32, #tpu.memory_space<vmem>>, vector<1x8xf32>,
    return
  }
  func.func @transform_0(%arg0: i32) -> (i32, i32) {
    %c0_i32 = arith.constant 0 : i32
    %c0_i32_0 = arith.constant 0 : i32
    return %arg0, %c0_i32 : i32, i32
  }
  func.func @transform_1(%arg0: i32) -> (i32, i32) {
    %c0_i32 = arith.constant 0 : i32
    %c0_i32_0 = arith.constant 0 : i32
    %c0_i32_1 = arith.constant 0 : i32
    return %c0_i32, %c0_i32_0 : i32, i32
  }
  func.func @transform_2(%arg0: i32) -> (i32, i32) {
    %c0_i32 = arith.constant 0 : i32
    %c0_i32_0 = arith.constant 0 : i32
    return %c0_i32, %arg0 : i32, i32
  }
  func.func @transform_3(%arg0: i32) -> (i32, i32) {
    %c0_i32 = arith.constant 0 : i32
    %c0_i32_0 = arith.constant 0 : i32
    return %c0_i32, %arg0 : i32, i32
  }
}

</mosaic_0001>

<llo_original>
// kernel: positive_weights_linear_forward.1
$region0: #{positive_weights_linear_forward.1}
  #allocation0 [shape = 'u32[]', space=smem, size = 0x4, offset = 0x4, fixed_abs, tag = 'smem constant byte address 0x4 - core index']
  #allocation1 [shape = 'u32[144,128]{1,0:T(1,128)}', space=vmem, size = 0x12000, scoped, tag = 'internal scratch']
  %s0 = inlined_call_operand.vmem [shape: f32[8,373], index: 0, kind: input, shape index: {}]
  %s1 = inlined_call_operand.vmem [shape: f32[256,373], index: 1, kind: input, shape index: {}]
  %s2 = inlined_call_operand.vmem [shape: s32[1,8], index: 2, kind: input, shape index: {}]
  %s3 = inlined_call_operand.vmem [shape: f32[1,8], index: 3, kind: output, shape index: {}]
  %s4 = sld [smem:[#allocation0]]
  $region22: #{positive_weights_linear_forward.1} parent=0
    _
  %s6 = ssub.s32 1, %s4
  %s7 = scalar_select 0, %s6, %s4
  // Predicated region
  $region2: #{positive_weights_linear_forward.1} parent=0 // pred_check
    _
  $region3: #{positive_weights_linear_forward.1} parent=0 // pred_check_branch
    %9 = sbr.rel (0) target = $region5
  $region4: #{positive_weights_linear_forward.1} parent=0 // pred_region
    _
  $region5: #{positive_weights_linear_forward.1} parent=0 // pred_fallthru
    _
  // Predicated region
  $region6: #{positive_weights_linear_forward.1} parent=0 // pred_check
    _
  $region7: #{positive_weights_linear_forward.1} parent=0 // pred_check_branch
    %11 = sbr.rel (0) target = $region9
  $region8: #{positive_weights_linear_forward.1} parent=0 // pred_region
    _
  $region9: #{positive_weights_linear_forward.1} parent=0 // pred_fallthru
    _
  // Predicated region
  $region10: #{positive_weights_linear_forward.1} parent=0 // pred_check
    _
  $region11: #{positive_weights_linear_forward.1} parent=0 // pred_check_branch
    %13 = sbr.rel (0) target = $region13
  $region12: #{positive_weights_linear_forward.1} parent=0 // pred_region
    _
  $region13: #{positive_weights_linear_forward.1} parent=0 // pred_fallthru
    _
  %v14 = vld [vmem:[%s1] sm:$0xff]
  %v15 = vld [vmem:[%s1 + $0x8] sm:$0xff]
  %v16 = vld [vmem:[%s1 + $0x10] sm:$0xff]
  %v17 = vld [vmem:[%s1 + $0x18] sm:$0xff]
  %v18 = vld [vmem:[%s1 + $0x20] sm:$0xff]
  %v19 = vld [vmem:[%s1 + $0x28] sm:$0xff]
  %v20 = vld [vmem:[%s1 + $0x30] sm:$0xff]
  %v21 = vld [vmem:[%s1 + $0x38] sm:$0xff]
  %v22 = vld [vmem:[%s1 + $0x40] sm:$0xff]
  %v23 = vld [vmem:[%s1 + $0x48] sm:$0xff]
  %v24 = vld [vmem:[%s1 + $0x50] sm:$0xff]
  %v25 = vld [vmem:[%s1 + $0x58] sm:$0xff]
  %v26 = vld [vmem:[%s1 + $0x60] sm:$0xff]
  %v27 = vld [vmem:[%s1 + $0x68] sm:$0xff]
  %v28 = vld [vmem:[%s1 + $0x70] sm:$0xff]
  %v29 = vld [vmem:[%s1 + $0x78] sm:$0xff]
  %v30 = vld [vmem:[%s1 + $0x80] sm:$0xff]
  %v31 = vld [vmem:[%s1 + $0x88] sm:$0xff]
  %v32 = vld [vmem:[%s1 + $0x90] sm:$0xff]
  %v33 = vld [vmem:[%s1 + $0x98] sm:$0xff]
  %v34 = vld [vmem:[%s1 + $0xa0] sm:$0xff]
  %v35 = vld [vmem:[%s1 + $0xa8] sm:$0xff]
  %v36 = vld [vmem:[%s1 + $0xb0] sm:$0xff]
  %v37 = vld [vmem:[%s1 + $0xb8] sm:$0xff]
  %v38 = vld [vmem:[%s1 + $0xc0] sm:$0xff]
  %v39 = vld [vmem:[%s1 + $0xc8] sm:$0xff]
  %v40 = vld [vmem:[%s1 + $0xd0] sm:$0xff]
  %v41 = vld [vmem:[%s1 + $0xd8] sm:$0xff]
  %v42 = vld [vmem:[%s1 + $0xe0] sm:$0xff]
  %v43 = vld [vmem:[%s1 + $0xe8] sm:$0xff]
  %v44 = vld [vmem:[%s1 + $0xf0] sm:$0xff]
  %v45 = vld [vmem:[%s1 + $0xf8] sm:$0xff]
  %v46 = vld [vmem:[%s1 + $0x100] sm:$0xff]
  %v47 = vld [vmem:[%s1 + $0x108] sm:$0xff]
  %v48 = vld [vmem:[%s1 + $0x110] sm:$0xff]
  %v49 = vld [vmem:[%s1 + $0x118] sm:$0xff]
  %v50 = vld [vmem:[%s1 + $0x120] sm:$0xff]
  %v51 = vld [vmem:[%s1 + $0x128] sm:$0xff]
  %v52 = vld [vmem:[%s1 + $0x130] sm:$0xff]
  %v53 = vld [vmem:[%s1 + $0x138] sm:$0xff]
  %v54 = vld [vmem:[%s1 + $0x140] sm:$0xff]
  %v55 = vld [vmem:[%s1 + $0x148] sm:$0xff]
  %v56 = vld [vmem:[%s1 + $0x150] sm:$0xff]
  %v57 = vld [vmem:[%s1 + $0x158] sm:$0xff]
  %v58 = vld [vmem:[%s1 + $0x160] sm:$0xff]
  %v59 = vld [vmem:[%s1 + $0x168] sm:$0xff]
  %v60 = vld [vmem:[%s1 + $0x170] sm:$0xff]
  %v61 = vld [vmem:[%s1 + $0x178] sm:$0xff]
  %v62 = vld [vmem:[%s1 + $0x180] sm:$0xff]
  %v63 = vld [vmem:[%s1 + $0x188] sm:$0xff]
  %v64 = vld [vmem:[%s1 + $0x190] sm:$0xff]
  %v65 = vld [vmem:[%s1 + $0x198] sm:$0xff]
  %v66 = vld [vmem:[%s1 + $0x1a0] sm:$0xff]
  %v67 = vld [vmem:[%s1 + $0x1a8] sm:$0xff]
  %v68 = vld [vmem:[%s1 + $0x1b0] sm:$0xff]
  %v69 = vld [vmem:[%s1 + $0x1b8] sm:$0xff]
  %v70 = vld [vmem:[%s1 + $0x1c0] sm:$0xff]
  %v71 = vld [vmem:[%s1 + $0x1c8] sm:$0xff]
  %v72 = vld [vmem:[%s1 + $0x1d0] sm:$0xff]
  %v73 = vld [vmem:[%s1 + $0x1d8] sm:$0xff]
  %v74 = vld [vmem:[%s1 + $0x1e0] sm:$0xff]
  %v75 = vld [vmem:[%s1 + $0x1e8] sm:$0xff]
  %v76 = vld [vmem:[%s1 + $0x1f0] sm:$0xff]
  %v77 = vld [vmem:[%s1 + $0x1f8] sm:$0xff]
  %v78 = vld [vmem:[%s1 + $0x200] sm:$0xff]
  %v79 = vld [vmem:[%s1 + $0x208] sm:$0xff]
  %v80 = vld [vmem:[%s1 + $0x210] sm:$0xff]
  %v81 = vld [vmem:[%s1 + $0x218] sm:$0xff]
  %v82 = vld [vmem:[%s1 + $0x220] sm:$0xff]
  %v83 = vld [vmem:[%s1 + $0x228] sm:$0xff]
  %v84 = vld [vmem:[%s1 + $0x230] sm:$0xff]
  %v85 = vld [vmem:[%s1 + $0x238] sm:$0xff]
  %v86 = vld [vmem:[%s1 + $0x240] sm:$0xff]
  %v87 = vld [vmem:[%s1 + $0x248] sm:$0xff]
  %v88 = vld [vmem:[%s1 + $0x250] sm:$0xff]
  %v89 = vld [vmem:[%s1 + $0x258] sm:$0xff]
  %v90 = vld [vmem:[%s1 + $0x260] sm:$0xff]
  %v91 = vld [vmem:[%s1 + $0x268] sm:$0xff]
  %v92 = vld [vmem:[%s1 + $0x270] sm:$0xff]
  %v93 = vld [vmem:[%s1 + $0x278] sm:$0xff]
  %v94 = vld [vmem:[%s1 + $0x280] sm:$0xff]
  %v95 = vld [vmem:[%s1 + $0x288] sm:$0xff]
  %v96 = vld [vmem:[%s1 + $0x290] sm:$0xff]
  %v97 = vld [vmem:[%s1 + $0x298] sm:$0xff]
  %v98 = vld [vmem:[%s1 + $0x2a0] sm:$0xff]
  %v99 = vld [vmem:[%s1 + $0x2a8] sm:$0xff]
  %v100 = vld [vmem:[%s1 + $0x2b0] sm:$0xff]
  %v101 = vld [vmem:[%s1 + $0x2b8] sm:$0xff]
  %v102 = vld [vmem:[%s1 + $0x2c0] sm:$0xff]
  %v103 = vld [vmem:[%s1 + $0x2c8] sm:$0xff]
  %v104 = vld [vmem:[%s1 + $0x2d0] sm:$0xff]
  %v105 = vld [vmem:[%s1 + $0x2d8] sm:$0xff]
  %v106 = vld [vmem:[%s1 + $0x2e0] sm:$0xff]
  %v107 = vld [vmem:[%s1 + $0x2e8] sm:$0xff]
  %v108 = vld [vmem:[%s1 + $0x2f0] sm:$0xff]
  %v109 = vld [vmem:[%s1 + $0x2f8] sm:$0xff]
  %v110 = vld [vmem:[%s0] sm:$0xff]
  %v111 = vld [vmem:[%s0 + $0x8] sm:$0xff]
  %v112 = vld [vmem:[%s0 + $0x10] sm:$0xff]
  %vm113 = vcmask 957440
  %v115 = vsel %vm113, %v16, 0
  %v118 = vsel %vm113, %v19, 0
  %v121 = vsel %vm113, %v22, 0
  %v124 = vsel %vm113, %v25, 0
  %v127 = vsel %vm113, %v28, 0
  %v130 = vsel %vm113, %v31, 0
  %v133 = vsel %vm113, %v34, 0
  %v136 = vsel %vm113, %v37, 0
  %v139 = vsel %vm113, %v40, 0
  %v142 = vsel %vm113, %v43, 0
  %v145 = vsel %vm113, %v46, 0
  %v148 = vsel %vm113, %v49, 0
  %v151 = vsel %vm113, %v52, 0
  %v154 = vsel %vm113, %v55, 0
  %v157 = vsel %vm113, %v58, 0
  %v160 = vsel %vm113, %v61, 0
  %v163 = vsel %vm113, %v64, 0
  %v166 = vsel %vm113, %v67, 0
  %v169 = vsel %vm113, %v70, 0
  %v172 = vsel %vm113, %v73, 0
  %v175 = vsel %vm113, %v76, 0
  %v178 = vsel %vm113, %v79, 0
  %v181 = vsel %vm113, %v82, 0
  %v184 = vsel %vm113, %v85, 0
  %v187 = vsel %vm113, %v88, 0
  %v190 = vsel %vm113, %v91, 0
  %v193 = vsel %vm113, %v94, 0
  %v196 = vsel %vm113, %v97, 0
  %v199 = vsel %vm113, %v100, 0
  %v202 = vsel %vm113, %v103, 0
  %v205 = vsel %vm113, %v106, 0
  %v208 = vsel %vm113, %v109, 0
  %v211 = vsel %vm113, %v112, 0
  %213 = vmatprep.subr.mxu0 0.0
  %214 = vmatpush1.xpose.msra.mxu0 0.0
  %215 = vmatprep.subr.mxu0 0.0
  %216 = vmatpush1.xpose.msra.mxu0 0.0
  %217 = vmatprep.subr.mxu0 0.0
  %218 = vmatpush1.xpose.msra.mxu0 0.0
  %219 = vmatprep.subr.mxu0 0.0
  %220 = vmatpush1.xpose.msra.mxu0 0.0
  %221 = vmatprep.subr.mxu0 0.0
  %222 = vmatpush1.xpose.msra.mxu0 0.0
  %223 = vmatprep.subr.mxu0 0.0
  %224 = vmatpush1.xpose.msra.mxu0 0.0
  %225 = vmatprep.subr.mxu0 0.0
  %226 = vmatpush1.xpose.msra.mxu0 0.0
  %227 = vmatprep.subr.mxu0 0.0
  %228 = vmatpush1.xpose.msra.mxu0 0.0
  %229 = vmatprep.subr.mxu0 0.0
  %230 = vmatpush1.xpose.msra.mxu0 0.0
  %231 = vmatprep.subr.mxu0 0.0
  %232 = vmatpush1.xpose.msra.mxu0 0.0
  %233 = vmatprep.subr.mxu0 0.0
  %234 = vmatpush1.xpose.msra.mxu0 0.0
  %235 = vmatprep.subr.mxu0 0.0
  %236 = vmatpush1.xpose.msra.mxu0 0.0
  %237 = vmatprep.subr.mxu0 0.0
  %238 = vmatpush1.xpose.msra.mxu0 0.0
  %239 = vmatprep.subr.mxu0 0.0
  %240 = vmatpush1.xpose.msra.mxu0 0.0
  %241 = vmatprep.subr.mxu0 0.0
  %242 = vmatpush1.xpose.msra.mxu0 0.0
  %243 = vmatprep.subr.mxu0 %v111
  %244 = vmatpush1.xpose.msra.mxu0 %v110
  %245 = vmatprep.subr.mxu0 0.0
  %246 = vmatpush2.xpose.msra.mxu0 0.0
  %247 = vmatprep.subr.mxu0 0.0
  %248 = vmatpush2.xpose.msra.mxu0 0.0
  %249 = vmatprep.subr.mxu0 0.0
  %250 = vmatpush2.xpose.msra.mxu0 0.0
  %251 = vmatprep.subr.mxu0 0.0
  %252 = vmatpush2.xpose.msra.mxu0 0.0
  %253 = vmatprep.subr.mxu0 0.0
  %254 = vmatpush2.xpose.msra.mxu0 0.0
  %255 = vmatprep.subr.mxu0 0.0
  %256 = vmatpush2.xpose.msra.mxu0 0.0
  %257 = vmatprep.subr.mxu0 0.0
  %258 = vmatpush2.xpose.msra.mxu0 0.0
  %259 = vmatprep.subr.mxu0 0.0
  %260 = vmatpush2.xpose.msra.mxu0 0.0
  %261 = vmatprep.subr.mxu0 0.0
  %262 = vmatpush2.xpose.msra.mxu0 0.0
  %263 = vmatprep.subr.mxu0 0.0
  %264 = vmatpush2.xpose.msra.mxu0 0.0
  %265 = vmatprep.subr.mxu0 0.0
  %266 = vmatpush2.xpose.msra.mxu0 0.0
  %267 = vmatprep.subr.mxu0 0.0
  %268 = vmatpush2.xpose.msra.mxu0 0.0
  %269 = vmatprep.subr.mxu0 0.0
  %270 = vmatpush2.xpose.msra.mxu0 0.0
  %271 = vmatprep.subr.mxu0 0.0
  %272 = vmatpush2.xpose.msra.mxu0 0.0
  %273 = vmatprep.subr.mxu0 0.0
  %274 = vmatpush2.xpose.msra.mxu0 0.0
  %275 = vmatprep.subr.mxu0 0.0
  %276 = vmatpush2.xpose.msra.mxu0 0.0
  %277 = vmatprep.mubr.f32.mxu0 %v15
  %278 = vmatmul.mubr.f32.gmra.mxu0 %v14
  %v279 = vpop.f32.mrf.mxu0
  %v280 = vadd.f32 0.0, %v279
  %v281 = vpop.f32.mrf.mxu0
  %282 = vmatprep.mubr.f32.mxu0 %v18
  %283 = vmatmul.mubr.f32.gmra.mxu0 %v17
  %v284 = vpop.f32.mrf.mxu0
  %v285 = vadd.f32 0.0, %v284
  %v286 = vpop.f32.mrf.mxu0
  %287 = vmatprep.mubr.f32.mxu0 %v21
  %288 = vmatmul.mubr.f32.gmra.mxu0 %v20
  %v289 = vpop.f32.mrf.mxu0
  %v290 = vadd.f32 0.0, %v289
  %v291 = vpop.f32.mrf.mxu0
  %292 = vmatprep.mubr.f32.mxu0 %v24
  %293 = vmatmul.mubr.f32.gmra.mxu0 %v23
  %v294 = vpop.f32.mrf.mxu0
  %v295 = vadd.f32 0.0, %v294
  %v296 = vpop.f32.mrf.mxu0
  %297 = vmatprep.mubr.f32.mxu0 %v27
  %298 = vmatmul.mubr.f32.gmra.mxu0 %v26
  %v299 = vpop.f32.mrf.mxu0
  %v300 = vadd.f32 0.0, %v299
  %v301 = vpop.f32.mrf.mxu0
  %302 = vmatprep.mubr.f32.mxu0 %v30
  %303 = vmatmul.mubr.f32.gmra.mxu0 %v29
  %v304 = vpop.f32.mrf.mxu0
  %v305 = vadd.f32 0.0, %v304
  %v306 = vpop.f32.mrf.mxu0
  %307 = vmatprep.mubr.f32.mxu0 %v33
  %308 = vmatmul.mubr.f32.gmra.mxu0 %v32
  %v309 = vpop.f32.mrf.mxu0
  %v310 = vadd.f32 0.0, %v309
  %v311 = vpop.f32.mrf.mxu0
  %312 = vmatprep.mubr.f32.mxu0 %v36
  %313 = vmatmul.mubr.f32.gmra.mxu0 %v35
  %v314 = vpop.f32.mrf.mxu0
  %v315 = vadd.f32 0.0, %v314
  %v316 = vpop.f32.mrf.mxu0
  %317 = vmatprep.mubr.f32.mxu0 %v39
  %318 = vmatmul.mubr.f32.gmra.mxu0 %v38
  %v319 = vpop.f32.mrf.mxu0
  %v320 = vadd.f32 0.0, %v319
  %v321 = vpop.f32.mrf.mxu0
  %322 = vmatprep.mubr.f32.mxu0 %v42
  %323 = vmatmul.mubr.f32.gmra.mxu0 %v41
  %v324 = vpop.f32.mrf.mxu0
  %v325 = vadd.f32 0.0, %v324
  %v326 = vpop.f32.mrf.mxu0
  %327 = vmatprep.mubr.f32.mxu0 %v45
  %328 = vmatmul.mubr.f32.gmra.mxu0 %v44
  %v329 = vpop.f32.mrf.mxu0
  %v330 = vadd.f32 0.0, %v329
  %v331 = vpop.f32.mrf.mxu0
  %332 = vmatprep.mubr.f32.mxu0 %v48
  %333 = vmatmul.mubr.f32.gmra.mxu0 %v47
  %v334 = vpop.f32.mrf.mxu0
  %v335 = vadd.f32 0.0, %v334
  %v336 = vpop.f32.mrf.mxu0
  %337 = vmatprep.mubr.f32.mxu0 %v51
  %338 = vmatmul.mubr.f32.gmra.mxu0 %v50
  %v339 = vpop.f32.mrf.mxu0
  %v340 = vadd.f32 0.0, %v339
  %v341 = vpop.f32.mrf.mxu0
  %342 = vmatprep.mubr.f32.mxu0 %v54
  %343 = vmatmul.mubr.f32.gmra.mxu0 %v53
  %v344 = vpop.f32.mrf.mxu0
  %v345 = vadd.f32 0.0, %v344
  %v346 = vpop.f32.mrf.mxu0
  %347 = vmatprep.mubr.f32.mxu0 %v57
  %348 = vmatmul.mubr.f32.gmra.mxu0 %v56
  %v349 = vpop.f32.mrf.mxu0
  %v350 = vadd.f32 0.0, %v349
  %v351 = vpop.f32.mrf.mxu0
  %352 = vmatprep.mubr.f32.mxu0 %v60
  %353 = vmatmul.mubr.f32.gmra.mxu0 %v59
  %v354 = vpop.f32.mrf.mxu0
  %v355 = vadd.f32 0.0, %v354
  %v356 = vpop.f32.mrf.mxu0
  %357 = vmatprep.mubr.f32.mxu0 %v63
  %358 = vmatmul.mubr.f32.gmra.mxu0 %v62
  %v359 = vpop.f32.mrf.mxu0
  %v360 = vadd.f32 0.0, %v359
  %v361 = vpop.f32.mrf.mxu0
  %362 = vmatprep.mubr.f32.mxu0 %v66
  %363 = vmatmul.mubr.f32.gmra.mxu0 %v65
  %v364 = vpop.f32.mrf.mxu0
  %v365 = vadd.f32 0.0, %v364
  %v366 = vpop.f32.mrf.mxu0
  %367 = vmatprep.mubr.f32.mxu0 %v69
  %368 = vmatmul.mubr.f32.gmra.mxu0 %v68
  %v369 = vpop.f32.mrf.mxu0
  %v370 = vadd.f32 0.0, %v369
  %v371 = vpop.f32.mrf.mxu0
  %372 = vmatprep.mubr.f32.mxu0 %v72
  %373 = vmatmul.mubr.f32.gmra.mxu0 %v71
  %v374 = vpop.f32.mrf.mxu0
  %v375 = vadd.f32 0.0, %v374
  %v376 = vpop.f32.mrf.mxu0
  %377 = vmatprep.mubr.f32.mxu0 %v75
  %378 = vmatmul.mubr.f32.gmra.mxu0 %v74
  %v379 = vpop.f32.mrf.mxu0
  %v380 = vadd.f32 0.0, %v379
  %v381 = vpop.f32.mrf.mxu0
  %382 = vmatprep.mubr.f32.mxu0 %v78
  %383 = vmatmul.mubr.f32.gmra.mxu0 %v77
  %v384 = vpop.f32.mrf.mxu0
  %v385 = vadd.f32 0.0, %v384
  %v386 = vpop.f32.mrf.mxu0
  %387 = vmatprep.mubr.f32.mxu0 %v81
  %388 = vmatmul.mubr.f32.gmra.mxu0 %v80
  %v389 = vpop.f32.mrf.mxu0
  %v390 = vadd.f32 0.0, %v389
  %v391 = vpop.f32.mrf.mxu0
  %392 = vmatprep.mubr.f32.mxu0 %v84
  %393 = vmatmul.mubr.f32.gmra.mxu0 %v83
  %v394 = vpop.f32.mrf.mxu0
  %v395 = vadd.f32 0.0, %v394
  %v396 = vpop.f32.mrf.mxu0
  %397 = vmatprep.mubr.f32.mxu0 %v87
  %398 = vmatmul.mubr.f32.gmra.mxu0 %v86
  %v399 = vpop.f32.mrf.mxu0
  %v400 = vadd.f32 0.0, %v399
  %v401 = vpop.f32.mrf.mxu0
  %402 = vmatprep.mubr.f32.mxu0 %v90
  %403 = vmatmul.mubr.f32.gmra.mxu0 %v89
  %v404 = vpop.f32.mrf.mxu0
  %v405 = vadd.f32 0.0, %v404
  %v406 = vpop.f32.mrf.mxu0
  %407 = vmatprep.mubr.f32.mxu0 %v93
  %408 = vmatmul.mubr.f32.gmra.mxu0 %v92
  %v409 = vpop.f32.mrf.mxu0
  %v410 = vadd.f32 0.0, %v409
  %v411 = vpop.f32.mrf.mxu0
  %412 = vmatprep.mubr.f32.mxu0 %v96
  %413 = vmatmul.mubr.f32.gmra.mxu0 %v95
  %v414 = vpop.f32.mrf.mxu0
  %v415 = vadd.f32 0.0, %v414
  %v416 = vpop.f32.mrf.mxu0
  %417 = vmatprep.mubr.f32.mxu0 %v99
  %418 = vmatmul.mubr.f32.gmra.mxu0 %v98
  %v419 = vpop.f32.mrf.mxu0
  %v420 = vadd.f32 0.0, %v419
  %v421 = vpop.f32.mrf.mxu0
  %422 = vmatprep.mubr.f32.mxu0 %v102
  %423 = vmatmul.mubr.f32.gmra.mxu0 %v101
  %v424 = vpop.f32.mrf.mxu0
  %v425 = vadd.f32 0.0, %v424
  %v426 = vpop.f32.mrf.mxu0
  %427 = vmatprep.mubr.f32.mxu0 %v105
  %428 = vmatmul.mubr.f32.gmra.mxu0 %v104
  %v429 = vpop.f32.mrf.mxu0
  %v430 = vadd.f32 0.0, %v429
  %v431 = vpop.f32.mrf.mxu0
  %432 = vmatprep.mubr.f32.mxu0 %v108
  %433 = vmatmul.mubr.f32.gmra.mxu0 %v107
  %v434 = vpop.f32.mrf.mxu0
  %v435 = vadd.f32 0.0, %v434
  %v436 = vpop.f32.mrf.mxu0
  %437 = vdwg.mxu0
  %438 = vmatprep.subr.mxu0 0.0
  %439 = vmatpush1.xpose.msra.mxu0 0.0
  %440 = vmatprep.subr.mxu0 0.0
  %441 = vmatpush1.xpose.msra.mxu0 0.0
  %442 = vmatprep.subr.mxu0 0.0
  %443 = vmatpush1.xpose.msra.mxu0 0.0
  %444 = vmatprep.subr.mxu0 0.0
  %445 = vmatpush1.xpose.msra.mxu0 0.0
  %446 = vmatprep.subr.mxu0 0.0
  %447 = vmatpush1.xpose.msra.mxu0 0.0
  %448 = vmatprep.subr.mxu0 0.0
  %449 = vmatpush1.xpose.msra.mxu0 0.0
  %450 = vmatprep.subr.mxu0 0.0
  %451 = vmatpush1.xpose.msra.mxu0 0.0
  %452 = vmatprep.subr.mxu0 0.0
  %453 = vmatpush1.xpose.msra.mxu0 0.0
  %454 = vmatprep.subr.mxu0 0.0
  %455 = vmatpush1.xpose.msra.mxu0 0.0
  %456 = vmatprep.subr.mxu0 0.0
  %457 = vmatpush1.xpose.msra.mxu0 0.0
  %458 = vmatprep.subr.mxu0 0.0
  %459 = vmatpush1.xpose.msra.mxu0 0.0
  %460 = vmatprep.subr.mxu0 0.0
  %461 = vmatpush1.xpose.msra.mxu0 0.0
  %462 = vmatprep.subr.mxu0 0.0
  %463 = vmatpush1.xpose.msra.mxu0 0.0
  %464 = vmatprep.subr.mxu0 0.0
  %465 = vmatpush1.xpose.msra.mxu0 0.0
  %466 = vmatprep.subr.mxu0 0.0
  %467 = vmatpush1.xpose.msra.mxu0 0.0
  %468 = vmatprep.subr.mxu0 0.0
  %469 = vmatpush1.xpose.msra.mxu0 %v211
  %470 = vmatprep.subr.mxu0 0.0
  %471 = vmatpush2.xpose.msra.mxu0 0.0
  %472 = vmatprep.subr.mxu0 0.0
  %473 = vmatpush2.xpose.msra.mxu0 0.0
  %474 = vmatprep.subr.mxu0 0.0
  %475 = vmatpush2.xpose.msra.mxu0 0.0
  %476 = vmatprep.subr.mxu0 0.0
  %477 = vmatpush2.xpose.msra.mxu0 0.0
  %478 = vmatprep.subr.mxu0 0.0
  %479 = vmatpush2.xpose.msra.mxu0 0.0
  %480 = vmatprep.subr.mxu0 0.0
  %481 = vmatpush2.xpose.msra.mxu0 0.0
  %482 = vmatprep.subr.mxu0 0.0
  %483 = vmatpush2.xpose.msra.mxu0 0.0
  %484 = vmatprep.subr.mxu0 0.0
  %485 = vmatpush2.xpose.msra.mxu0 0.0
  %486 = vmatprep.subr.mxu0 0.0
  %487 = vmatpush2.xpose.msra.mxu0 0.0
  %488 = vmatprep.subr.mxu0 0.0
  %489 = vmatpush2.xpose.msra.mxu0 0.0
  %490 = vmatprep.subr.mxu0 0.0
  %491 = vmatpush2.xpose.msra.mxu0 0.0
  %492 = vmatprep.subr.mxu0 0.0
  %493 = vmatpush2.xpose.msra.mxu0 0.0
  %494 = vmatprep.subr.mxu0 0.0
  %495 = vmatpush2.xpose.msra.mxu0 0.0
  %496 = vmatprep.subr.mxu0 0.0
  %497 = vmatpush2.xpose.msra.mxu0 0.0
  %498 = vmatprep.subr.mxu0 0.0
  %499 = vmatpush2.xpose.msra.mxu0 0.0
  %500 = vmatprep.subr.mxu0 0.0
  %501 = vmatpush2.xpose.msra.mxu0 0.0
  %502 = vmatprep.mubr.f32.mxu0 0.0
  %503 = vmatmul.mubr.f32.gmra.mxu0 %v115
  %v504 = vpop.f32.mrf.mxu0
  %v505 = vadd.f32 %v280, %v504
  %v506 = vpop.f32.mrf.mxu0
  %507 = vmatprep.mubr.f32.mxu0 0.0
  %508 = vmatmul.mubr.f32.gmra.mxu0 %v118
  %v509 = vpop.f32.mrf.mxu0
  %v510 = vadd.f32 %v285, %v509
  %v511 = vpop.f32.mrf.mxu0
  %512 = vmatprep.mubr.f32.mxu0 0.0
  %513 = vmatmul.mubr.f32.gmra.mxu0 %v121
  %v514 = vpop.f32.mrf.mxu0
  %v515 = vadd.f32 %v290, %v514
  %v516 = vpop.f32.mrf.mxu0
  %517 = vmatprep.mubr.f32.mxu0 0.0
  %518 = vmatmul.mubr.f32.gmra.mxu0 %v124
  %v519 = vpop.f32.mrf.mxu0
  %v520 = vadd.f32 %v295, %v519
  %v521 = vpop.f32.mrf.mxu0
  %522 = vmatprep.mubr.f32.mxu0 0.0
  %523 = vmatmul.mubr.f32.gmra.mxu0 %v127
  %v524 = vpop.f32.mrf.mxu0
  %v525 = vadd.f32 %v300, %v524
  %v526 = vpop.f32.mrf.mxu0
  %527 = vmatprep.mubr.f32.mxu0 0.0
  %528 = vmatmul.mubr.f32.gmra.mxu0 %v130
  %v529 = vpop.f32.mrf.mxu0
  %v530 = vadd.f32 %v305, %v529
  %v531 = vpop.f32.mrf.mxu0
  %532 = vmatprep.mubr.f32.mxu0 0.0
  %533 = vmatmul.mubr.f32.gmra.mxu0 %v133
  %v534 = vpop.f32.mrf.mxu0
  %v535 = vadd.f32 %v310, %v534
  %v536 = vpop.f32.mrf.mxu0
  %537 = vmatprep.mubr.f32.mxu0 0.0
  %538 = vmatmul.mubr.f32.gmra.mxu0 %v136
  %v539 = vpop.f32.mrf.mxu0
  %v540 = vadd.f32 %v315, %v539
  %v541 = vpop.f32.mrf.mxu0
  %542 = vmatprep.mubr.f32.mxu0 0.0
  %543 = vmatmul.mubr.f32.gmra.mxu0 %v139
  %v544 = vpop.f32.mrf.mxu0
  %v545 = vadd.f32 %v320, %v544
  %v546 = vpop.f32.mrf.mxu0
  %547 = vmatprep.mubr.f32.mxu0 0.0
  %548 = vmatmul.mubr.f32.gmra.mxu0 %v142
  %v549 = vpop.f32.mrf.mxu0
  %v550 = vadd.f32 %v325, %v549
  %v551 = vpop.f32.mrf.mxu0
  %552 = vmatprep.mubr.f32.mxu0 0.0
  %553 = vmatmul.mubr.f32.gmra.mxu0 %v145
  %v554 = vpop.f32.mrf.mxu0
  %v555 = vadd.f32 %v330, %v554
  %v556 = vpop.f32.mrf.mxu0
  %557 = vmatprep.mubr.f32.mxu0 0.0
  %558 = vmatmul.mubr.f32.gmra.mxu0 %v148
  %v559 = vpop.f32.mrf.mxu0
  %v560 = vadd.f32 %v335, %v559
  %v561 = vpop.f32.mrf.mxu0
  %562 = vmatprep.mubr.f32.mxu0 0.0
  %563 = vmatmul.mubr.f32.gmra.mxu0 %v151
  %v564 = vpop.f32.mrf.mxu0
  %v565 = vadd.f32 %v340, %v564
  %v566 = vpop.f32.mrf.mxu0
  %567 = vmatprep.mubr.f32.mxu0 0.0
  %568 = vmatmul.mubr.f32.gmra.mxu0 %v154
  %v569 = vpop.f32.mrf.mxu0
  %v570 = vadd.f32 %v345, %v569
  %v571 = vpop.f32.mrf.mxu0
  %572 = vmatprep.mubr.f32.mxu0 0.0
  %573 = vmatmul.mubr.f32.gmra.mxu0 %v157
  %v574 = vpop.f32.mrf.mxu0
  %v575 = vadd.f32 %v350, %v574
  %v576 = vpop.f32.mrf.mxu0
  %577 = vmatprep.mubr.f32.mxu0 0.0
  %578 = vmatmul.mubr.f32.gmra.mxu0 %v160
  %v579 = vpop.f32.mrf.mxu0
  %v580 = vadd.f32 %v355, %v579
  %v581 = vpop.f32.mrf.mxu0
  %582 = vmatprep.mubr.f32.mxu0 0.0
  %583 = vmatmul.mubr.f32.gmra.mxu0 %v163
  %v584 = vpop.f32.mrf.mxu0
  %v585 = vadd.f32 %v360, %v584
  %v586 = vpop.f32.mrf.mxu0
  %587 = vmatprep.mubr.f32.mxu0 0.0
  %588 = vmatmul.mubr.f32.gmra.mxu0 %v166
  %v589 = vpop.f32.mrf.mxu0
  %v590 = vadd.f32 %v365, %v589
  %v591 = vpop.f32.mrf.mxu0
  %592 = vmatprep.mubr.f32.mxu0 0.0
  %593 = vmatmul.mubr.f32.gmra.mxu0 %v169
  %v594 = vpop.f32.mrf.mxu0
  %v595 = vadd.f32 %v370, %v594
  %v596 = vpop.f32.mrf.mxu0
  %597 = vmatprep.mubr.f32.mxu0 0.0
  %598 = vmatmul.mubr.f32.gmra.mxu0 %v172
  %v599 = vpop.f32.mrf.mxu0
  %v600 = vadd.f32 %v375, %v599
  %v601 = vpop.f32.mrf.mxu0
  %602 = vmatprep.mubr.f32.mxu0 0.0
  %603 = vmatmul.mubr.f32.gmra.mxu0 %v175
  %v604 = vpop.f32.mrf.mxu0
  %v605 = vadd.f32 %v380, %v604
  %v606 = vpop.f32.mrf.mxu0
  %607 = vmatprep.mubr.f32.mxu0 0.0
  %608 = vmatmul.mubr.f32.gmra.mxu0 %v178
  %v609 = vpop.f32.mrf.mxu0
  %v610 = vadd.f32 %v385, %v609
  %v611 = vpop.f32.mrf.mxu0
  %612 = vmatprep.mubr.f32.mxu0 0.0
  %613 = vmatmul.mubr.f32.gmra.mxu0 %v181
  %v614 = vpop.f32.mrf.mxu0
  %v615 = vadd.f32 %v390, %v614
  %v616 = vpop.f32.mrf.mxu0
  %617 = vmatprep.mubr.f32.mxu0 0.0
  %618 = vmatmul.mubr.f32.gmra.mxu0 %v184
  %v619 = vpop.f32.mrf.mxu0
  %v620 = vadd.f32 %v395, %v619
  %v621 = vpop.f32.mrf.mxu0
  %622 = vmatprep.mubr.f32.mxu0 0.0
  %623 = vmatmul.mubr.f32.gmra.mxu0 %v187
  %v624 = vpop.f32.mrf.mxu0
  %v625 = vadd.f32 %v400, %v624
  %v626 = vpop.f32.mrf.mxu0
  %627 = vmatprep.mubr.f32.mxu0 0.0
  %628 = vmatmul.mubr.f32.gmra.mxu0 %v190
  %v629 = vpop.f32.mrf.mxu0
  %v630 = vadd.f32 %v405, %v629
  %v631 = vpop.f32.mrf.mxu0
  %632 = vmatprep.mubr.f32.mxu0 0.0
  %633 = vmatmul.mubr.f32.gmra.mxu0 %v193
  %v634 = vpop.f32.mrf.mxu0
  %v635 = vadd.f32 %v410, %v634
  %v636 = vpop.f32.mrf.mxu0
  %637 = vmatprep.mubr.f32.mxu0 0.0
  %638 = vmatmul.mubr.f32.gmra.mxu0 %v196
  %v639 = vpop.f32.mrf.mxu0
  %v640 = vadd.f32 %v415, %v639
  %v641 = vpop.f32.mrf.mxu0
  %642 = vmatprep.mubr.f32.mxu0 0.0
  %643 = vmatmul.mubr.f32.gmra.mxu0 %v199
  %v644 = vpop.f32.mrf.mxu0
  %v645 = vadd.f32 %v420, %v644
  %v646 = vpop.f32.mrf.mxu0
  %647 = vmatprep.mubr.f32.mxu0 0.0
  %648 = vmatmul.mubr.f32.gmra.mxu0 %v202
  %v649 = vpop.f32.mrf.mxu0
  %v650 = vadd.f32 %v425, %v649
  %v651 = vpop.f32.mrf.mxu0
  %652 = vmatprep.mubr.f32.mxu0 0.0
  %653 = vmatmul.mubr.f32.gmra.mxu0 %v205
  %v654 = vpop.f32.mrf.mxu0
  %v655 = vadd.f32 %v430, %v654
  %v656 = vpop.f32.mrf.mxu0
  %657 = vmatprep.mubr.f32.mxu0 0.0
  %658 = vmatmul.mubr.f32.gmra.mxu0 %v208
  %v659 = vpop.f32.mrf.mxu0
  %v660 = vadd.f32 %v435, %v659
  %v661 = vpop.f32.mrf.mxu0
  %662 = vdwg.mxu0
  %v663 = vlaneseq
  %v664 = vshrl.u32 %v663, 7
  %v665 = vadd.s32 %v664, 8
  %v666 = vadd.s32 %v664, 16
  %v667 = vadd.s32 %v664, 24
  %v668 = vadd.s32 %v664, 32
  %v669 = vadd.s32 %v664, 40
  %v670 = vadd.s32 %v664, 48
  %v671 = vadd.s32 %v664, 56
  %v672 = vadd.s32 %v664, 64
  %v673 = vadd.s32 %v664, 72
  %v674 = vadd.s32 %v664, 80
  %v675 = vadd.s32 %v664, 88
  %v676 = vadd.s32 %v664, 96
  %v677 = vadd.s32 %v664, 104
  %v678 = vadd.s32 %v664, 112
  %v679 = vadd.s32 %v664, 120
  %v680 = vadd.s32 %v664, 128
  %v681 = vadd.s32 %v664, 136
  %v682 = vadd.s32 %v664, 144
  %v683 = vadd.s32 %v664, 152
  %v684 = vadd.s32 %v664, 160
  %v685 = vadd.s32 %v664, 168
  %v686 = vadd.s32 %v664, 176
  %v687 = vadd.s32 %v664, 184
  %v688 = vadd.s32 %v664, 192
  %v689 = vadd.s32 %v664, 200
  %v690 = vadd.s32 %v664, 208
  %v691 = vadd.s32 %v664, 216
  %v692 = vadd.s32 %v664, 224
  %v693 = vadd.s32 %v664, 232
  %v694 = vadd.s32 %v664, 240
  %v695 = vadd.s32 %v664, 248
  %v696 = vld [vmem:[%s2] sm:$0x1]
  %v697 = vlaneseq
  %v698 = vshrl.u32 %v697, 7
  %v699 = vsub.s32 0, %v698
  %v700 = vrot.slane %v696, %v699
  %vm701 = vcmp.eq.s32.totalorder %v664, %v700
  %vm702 = vcmp.eq.s32.totalorder %v665, %v700
  %vm703 = vcmp.eq.s32.totalorder %v666, %v700
  %vm704 = vcmp.eq.s32.totalorder %v667, %v700
  %vm705 = vcmp.eq.s32.totalorder %v668, %v700
  %vm706 = vcmp.eq.s32.totalorder %v669, %v700
  %vm707 = vcmp.eq.s32.totalorder %v670, %v700
  %vm708 = vcmp.eq.s32.totalorder %v671, %v700
  %vm709 = vcmp.eq.s32.totalorder %v672, %v700
  %vm710 = vcmp.eq.s32.totalorder %v673, %v700
  %vm711 = vcmp.eq.s32.totalorder %v674, %v700
  %vm712 = vcmp.eq.s32.totalorder %v675, %v700
  %vm713 = vcmp.eq.s32.totalorder %v676, %v700
  %vm714 = vcmp.eq.s32.totalorder %v677, %v700
  %vm715 = vcmp.eq.s32.totalorder %v678, %v700
  %vm716 = vcmp.eq.s32.totalorder %v679, %v700
  %vm717 = vcmp.eq.s32.totalorder %v680, %v700
  %vm718 = vcmp.eq.s32.totalorder %v681, %v700
  %vm719 = vcmp.eq.s32.totalorder %v682, %v700
  %vm720 = vcmp.eq.s32.totalorder %v683, %v700
  %vm721 = vcmp.eq.s32.totalorder %v684, %v700
  %vm722 = vcmp.eq.s32.totalorder %v685, %v700
  %vm723 = vcmp.eq.s32.totalorder %v686, %v700
  %vm724 = vcmp.eq.s32.totalorder %v687, %v700
  %vm725 = vcmp.eq.s32.totalorder %v688, %v700
  %vm726 = vcmp.eq.s32.totalorder %v689, %v700
  %vm727 = vcmp.eq.s32.totalorder %v690, %v700
  %vm728 = vcmp.eq.s32.totalorder %v691, %v700
  %vm729 = vcmp.eq.s32.totalorder %v692, %v700
  %vm730 = vcmp.eq.s32.totalorder %v693, %v700
  %vm731 = vcmp.eq.s32.totalorder %v694, %v700
  %vm732 = vcmp.eq.s32.totalorder %v695, %v700
  %v733 = vsel %vm701, %v505, 0.0
  %v734 = vsel %vm702, %v510, 0.0
  %v735 = vsel %vm703, %v515, 0.0
  %v736 = vsel %vm704, %v520, 0.0
  %v737 = vsel %vm705, %v525, 0.0
  %v738 = vsel %vm706, %v530, 0.0
  %v739 = vsel %vm707, %v535, 0.0
  %v740 = vsel %vm708, %v540, 0.0
  %v741 = vsel %vm709, %v545, 0.0
  %v742 = vsel %vm710, %v550, 0.0
  %v743 = vsel %vm711, %v555, 0.0
  %v744 = vsel %vm712, %v560, 0.0
  %v745 = vsel %vm713, %v565, 0.0
  %v746 = vsel %vm714, %v570, 0.0
  %v747 = vsel %vm715, %v575, 0.0
  %v748 = vsel %vm716, %v580, 0.0
  %v749 = vsel %vm717, %v585, 0.0
  %v750 = vsel %vm718, %v590, 0.0
  %v751 = vsel %vm719, %v595, 0.0
  %v752 = vsel %vm720, %v600, 0.0
  %v753 = vsel %vm721, %v605, 0.0
  %v754 = vsel %vm722, %v610, 0.0
  %v755 = vsel %vm723, %v615, 0.0
  %v756 = vsel %vm724, %v620, 0.0
  %v757 = vsel %vm725, %v625, 0.0
  %v758 = vsel %vm726, %v630, 0.0
  %v759 = vsel %vm727, %v635, 0.0
  %v760 = vsel %vm728, %v640, 0.0
  %v761 = vsel %vm729, %v645, 0.0
  %v762 = vsel %vm730, %v650, 0.0
  %v763 = vsel %vm731, %v655, 0.0
  %v764 = vsel %vm732, %v660, 0.0
  %vm765 = vcmask 64512
  %v766 = vsel %vm765, %v733, 0.0
  %v767 = vsel %vm765, %v734, 0.0
  %v768 = vadd.f32 %v766, %v767
  %v769 = vsel %vm765, %v735, 0.0
  %v770 = vadd.f32 %v768, %v769
  %v771 = vsel %vm765, %v736, 0.0
  %v772 = vadd.f32 %v770, %v771
  %v773 = vsel %vm765, %v737, 0.0
  %v774 = vadd.f32 %v772, %v773
  %v775 = vsel %vm765, %v738, 0.0
  %v776 = vadd.f32 %v774, %v775
  %v777 = vsel %vm765, %v739, 0.0
  %v778 = vadd.f32 %v776, %v777
  %v779 = vsel %vm765, %v740, 0.0
  %v780 = vadd.f32 %v778, %v779
  %v781 = vsel %vm765, %v741, 0.0
  %v782 = vadd.f32 %v780, %v781
  %v783 = vsel %vm765, %v742, 0.0
  %v784 = vadd.f32 %v782, %v783
  %v785 = vsel %vm765, %v743, 0.0
  %v786 = vadd.f32 %v784, %v785
  %v787 = vsel %vm765, %v744, 0.0
  %v788 = vadd.f32 %v786, %v787
  %v789 = vsel %vm765, %v745, 0.0
  %v790 = vadd.f32 %v788, %v789
  %v791 = vsel %vm765, %v746, 0.0
  %v792 = vadd.f32 %v790, %v791
  %v793 = vsel %vm765, %v747, 0.0
  %v794 = vadd.f32 %v792, %v793
  %v795 = vsel %vm765, %v748, 0.0
  %v796 = vadd.f32 %v794, %v795
  %v797 = vsel %vm765, %v749, 0.0
  %v798 = vadd.f32 %v796, %v797
  %v799 = vsel %vm765, %v750, 0.0
  %v800 = vadd.f32 %v798, %v799
  %v801 = vsel %vm765, %v751, 0.0
  %v802 = vadd.f32 %v800, %v801
  %v803 = vsel %vm765, %v752, 0.0
  %v804 = vadd.f32 %v802, %v803
  %v805 = vsel %vm765, %v753, 0.0
  %v806 = vadd.f32 %v804, %v805
  %v807 = vsel %vm765, %v754, 0.0
  %v808 = vadd.f32 %v806, %v807
  %v809 = vsel %vm765, %v755, 0.0
  %v810 = vadd.f32 %v808, %v809
  %v811 = vsel %vm765, %v756, 0.0
  %v812 = vadd.f32 %v810, %v811
  %v813 = vsel %vm765, %v757, 0.0
  %v814 = vadd.f32 %v812, %v813
  %v815 = vsel %vm765, %v758, 0.0
  %v816 = vadd.f32 %v814, %v815
  %v817 = vsel %vm765, %v759, 0.0
  %v818 = vadd.f32 %v816, %v817
  %v819 = vsel %vm765, %v760, 0.0
  %v820 = vadd.f32 %v818, %v819
  %v821 = vsel %vm765, %v761, 0.0
  %v822 = vadd.f32 %v820, %v821
  %v823 = vsel %vm765, %v762, 0.0
  %v824 = vadd.f32 %v822, %v823
  %v825 = vsel %vm765, %v763, 0.0
  %v826 = vadd.f32 %v824, %v825
  %v827 = vsel %vm765, %v764, 0.0
  %v828 = vadd.f32 %v826, %v827
  %v829 = vrot.slane %v828, 4
  %v830 = vadd.f32 %v828, %v829
  %v831 = vrot.slane %v830, 2
  %v832 = vadd.f32 %v830, %v831
  %v833 = vrot.slane %v832, 1
  %v834 = vadd.f32 %v832, %v833
  %vm835 = vcmask 57344
  %836 = vst.msk [vmem:[%s3] sm:$0x1] %vm835, %v834
  // Predicated region
  $region14: #{positive_weights_linear_forward.1} parent=0 // pred_check
    _
  $region15: #{positive_weights_linear_forward.1} parent=0 // pred_check_branch
    %838 = sbr.rel (0) target = $region17
  $region16: #{positive_weights_linear_forward.1} parent=0 // pred_region
    _
  $region17: #{positive_weights_linear_forward.1} parent=0 // pred_fallthru
    _
  // Predicated region
  $region18: #{positive_weights_linear_forward.1} parent=0 // pred_check
    _
  $region19: #{positive_weights_linear_forward.1} parent=0 // pred_check_branch
    %840 = sbr.rel (0) target = $region21
  $region20: #{positive_weights_linear_forward.1} parent=0 // pred_region
    _
  $region21: #{positive_weights_linear_forward.1} parent=0 // pred_fallthru
    _

</llo_original>
